<compile_context>
chip_gen: v7x
topology: tpu7x:2x2x1
jax: 0.10.0
libtpu: 0.0.40
codegen_flags: <defaults>
</compile_context>

<pallas_src>
import jax
import jax.numpy as jnp
from jax import lax
from jax.experimental import pallas as pl
from jax.experimental.pallas import tpu as pltpu


# ----------------------------- model config ---------------------------------
INPUT_SIZE = 16
HIDDEN_SIZE = 32
NUM_HIDDEN_LAYERS = 3
OUTPUT_SIZE = 8
EPSILON = 0.01
H_STEP = 1.0          # self.h
BATCH = 16            # whole batch handled in a single kernel invocation

LANE = 128                       # hidden width padded 32 -> 128 lanes
_NBLK = NUM_HIDDEN_LAYERS + 1    # input_layer + L untied input layers
_SLAB_W = _NBLK * LANE           # 512 lanes

# Row offsets inside the packed parameter slab (all multiples of 8):
_R_WCAT = 0                          # [In,  512]  fused u-side weights
_R_BCAT = _R_WCAT + INPUT_SIZE       # [8,   512]  fused u-side biases (row 0)
_R_BIG = _R_BCAT + 8                 # [128, 512]  A_0 | A_1 | A_2 | W_out
_R_BOUT = _R_BIG + LANE              # [8,   512]  output bias (row 0)
_SLAB_ROWS = _R_BOUT + 8             # 160


# ------------------------------- kernel --------------------------------------
def _nais_kernel(u_ref, p_ref, o_ref):
    f32 = jnp.float32
    L = NUM_HIDDEN_LAYERS

    u = u_ref[...].astype(f32)                                        # [B, In]

    w_cat = p_ref[_R_WCAT:_R_WCAT + INPUT_SIZE, :]                    # [In, 512]
    b_cat = p_ref[_R_BCAT:_R_BCAT + 1, :]                             # [1, 512]

    # One lane-dense matmul for ALL u-side projections:
    #   lane block 0       -> input_layer
    #   lane block (i + 1) -> hidden_layers_input[i]
    uw = jnp.dot(u, w_cat, preferred_element_type=f32) + b_cat        # [B, 512]

    # x = h * tanh(input_layer(u)); lanes 32..127 are exactly 0 (zero padding).
    x = H_STEP * jnp.tanh(uw[:, 0:LANE])                              # [B, 128]

    for i in range(L):                                                # static unroll
        a_i = p_ref[_R_BIG:_R_BIG + LANE, i * LANE:(i + 1) * LANE]    # [128, 128]
        inp = uw[:, (i + 1) * LANE:(i + 2) * LANE]                    # [B, 128]
        # NOTE: A_i = -(scale * R^T R) - eps*I is symmetric, so
        #   F.linear(x, A_i) == x @ A_i.T == x @ A_i.
        # Do NOT reuse this shortcut for a non-Gram (non-symmetric) A.
        state = jnp.dot(x, a_i, preferred_element_type=f32)
        x = x + H_STEP * jnp.tanh(state + inp)

    w_out = p_ref[_R_BIG:_R_BIG + LANE, L * LANE:(L + 1) * LANE]      # [128, 128]
    b_out = p_ref[_R_BOUT:_R_BOUT + 1, 0:LANE]                        # [1, 128]
    o_ref[...] = (jnp.dot(x, w_out, preferred_element_type=f32)
                  + b_out).astype(o_ref.dtype)                        # [B, 128]


# ------------------------- wrapper (hoisted prep) -----------------------------
def _build_a_stack(r_stack, epsilon):
    """Batch-independent A_i = -(proj(R_i^T R_i)) - eps*I, built once outside
    the kernel (no explicit transpose materialized)."""
    eye = jnp.eye(r_stack.shape[1], dtype=jnp.float32)
    delta = jnp.float32(1.0 - 2.0 * epsilon)

    def one(R):
        RtR = lax.dot_general(R, R, (((0,), (0,)), ((), ())),
                              preferred_element_type=jnp.float32)
        norm = jnp.sqrt(jnp.sum(RtR * RtR))                       # Frobenius
        # Division only used when norm > delta (= 0.98), so it is safe.
        scale = jnp.where(norm > delta, delta / norm, jnp.float32(1.0))
        return -(scale * RtR) - epsilon * eye

    return jax.vmap(one)(r_stack)


def _pack_params(params):
    """Pack every constant operand into one contiguous f32 slab [160, 512]."""
    (w_in, b_in, r_stack, w_u_stack, b_u_stack, w_out, b_out) = params
    L, hd, _ = r_stack.shape
    out = w_out.shape[1]

    def pad_cols(m):
        m = m.astype(jnp.float32)
        return jnp.pad(m, ((0, 0), (0, LANE - m.shape[1])))

    # Fused u-side weights / biases; each layer occupies a 128-lane block.
    w_cat = jnp.concatenate([pad_cols(w_in)] +
                            [pad_cols(w_u_stack[i]) for i in range(L)],
                            axis=1)                                   # [In, 512]
    b_cat = jnp.concatenate([pad_cols(b_in)] +
                            [pad_cols(b_u_stack[i]) for i in range(L)],
                            axis=1)                                   # [1, 512]
    b_cat = jnp.pad(b_cat, ((0, 7), (0, 0)))                          # [8, 512]

    # Stable-state matrices padded to [128,128] + padded W_out, side by side.
    a_stack = _build_a_stack(r_stack, EPSILON)                        # [L, 32, 32]
    a_pad = jnp.pad(a_stack, ((0, 0), (0, LANE - hd), (0, LANE - hd)))
    w_out_pad = jnp.pad(w_out.astype(jnp.float32),
                        ((0, LANE - hd), (0, LANE - out)))            # [128, 128]
    big = jnp.concatenate([a_pad[i] for i in range(L)] + [w_out_pad],
                          axis=1)                                     # [128, 512]

    b_out_pad = jnp.pad(b_out.astype(jnp.float32),
                        ((0, 7), (0, _SLAB_W - out)))                 # [8, 512]

    slab = jnp.concatenate([w_cat, b_cat, big, b_out_pad], axis=0)    # [160, 512]
    return slab


@jax.jit
def nais_net_untied_forward(u, params):
    B, In = u.shape
    L = NUM_HIDDEN_LAYERS
    slab = _pack_params(params)

    flops = 2 * B * (In * _SLAB_W + (L + 1) * LANE * LANE)
    transcendentals = B * LANE * (L + 1)
    bytes_accessed = 4 * (B * In + _SLAB_ROWS * _SLAB_W + B * LANE)

    out_pad = pl.pallas_call(
        _nais_kernel,
        out_shape=jax.ShapeDtypeStruct((B, LANE), jnp.float32),
        in_specs=[
            pl.BlockSpec(memory_space=pltpu.MemorySpace.VMEM),   # u
            pl.BlockSpec(memory_space=pltpu.MemorySpace.VMEM),   # param slab
        ],
        out_specs=pl.BlockSpec(memory_space=pltpu.MemorySpace.VMEM),
        cost_estimate=pl.CostEstimate(flops=flops,
                                      transcendentals=transcendentals,
                                      bytes_accessed=bytes_accessed),
    )(u.astype(jnp.float32), slab)

    # Columns OUTPUT_SIZE..127 are exactly zero by construction.
    return out_pad[:, :OUTPUT_SIZE]


# --------------------- pure-JAX reference (torch semantics) -----------------
def nais_net_untied_ref(u, params):
    (w_in, b_in, r_stack, w_u_stack, b_u_stack, w_out, b_out) = params
    x = H_STEP * jnp.tanh(u @ w_in + b_in)
    eye = jnp.eye(HIDDEN_SIZE, dtype=jnp.float32)
    delta = 1.0 - 2.0 * EPSILON
    for i in range(r_stack.shape[0]):
        R = r_stack[i]
        RtR = R.T @ R
        norm = jnp.sqrt(jnp.sum(RtR * RtR))
        RtR = jnp.where(norm > delta, delta * RtR / norm, RtR)
        A = -RtR - EPSILON * eye
        x = x + H_STEP * jnp.tanh(x @ A.T + u @ w_u_stack[i] + b_u_stack[i])
    return x @ w_out + b_out


# ------------------------ deterministic parameter init ----------------------
def init_params(key):
    ks = jax.random.split(key, 8)

    def unif(k, shape, fan_in):
        bound = 1.0 / jnp.sqrt(fan_in)
        return jax.random.uniform(k, shape, jnp.float32, -bound, bound)

    w_in = unif(ks[0], (INPUT_SIZE, HIDDEN_SIZE), INPUT_SIZE)
    b_in = unif(ks[1], (1, HIDDEN_SIZE), INPUT_SIZE)
    r_stack = unif(ks[2], (NUM_HIDDEN_LAYERS, HIDDEN_SIZE, HIDDEN_SIZE),
                   HIDDEN_SIZE)
    w_u_stack = unif(ks[3], (NUM_HIDDEN_LAYERS, INPUT_SIZE, HIDDEN_SIZE),
                     INPUT_SIZE)
    b_u_stack = unif(ks[4], (NUM_HIDDEN_LAYERS, 1, HIDDEN_SIZE), INPUT_SIZE)
    w_out = unif(ks[5], (HIDDEN_SIZE, OUTPUT_SIZE), HIDDEN_SIZE)
    b_out = unif(ks[6], (1, OUTPUT_SIZE), HIDDEN_SIZE)
    return (w_in, b_in, r_stack, w_u_stack, b_u_stack, w_out, b_out)


if __name__ == "__main__":
    key = jax.random.PRNGKey(0)
    kp, kx = jax.random.split(key)
    params = init_params(kp)
    u = jax.random.normal(kx, (BATCH, INPUT_SIZE), jnp.float32)

    out = jax.block_until_ready(nais_net_untied_forward(u, params))
    ref = nais_net_untied_ref(u, params)

    assert out.shape == (BATCH, OUTPUT_SIZE)
    max_err = jnp.max(jnp.abs(out - ref))
    assert jnp.allclose(out, ref, atol=1e-5, rtol=1e-5), (
        f"max abs err = {max_err}")
    print("KERNEL_OK")
</pallas_src>

<mosaic_0001>
module attributes {stable_mosaic.version = 11 : i64} {
  func.func @_nais_kernel(%arg0: memref<16x16xf32, #tpu.memory_space<vmem>>, %arg1: memref<160x512xf32, #tpu.memory_space<vmem>>, %arg2: memref<16x128xf32, #tpu.memory_space<vmem>>) attributes {dimension_semantics = [], scalar_prefetch = 0 : i64, scratch_operands = 0 : i64, tpu.core_type = #tpu.core_type<tc>} {
    %c0 = arith.constant 0 : index
    %c0_0 = arith.constant 0 : index
    %0 = vector.load %arg0[%c0, %c0_0] : memref<16x16xf32, #tpu.memory_space<vmem>>, vector<16x16xf32>
    %c0_1 = arith.constant 0 : index
    %c0_2 = arith.constant 0 : index
    %1 = vector.load %arg1[%c0_1, %c0_2] : memref<160x512xf32, #tpu.memory_space<vmem>>, vector<16x512xf32>
    %c16 = arith.constant 16 : index
    %c0_3 = arith.constant 0 : index
    %2 = vector.load %arg1[%c16, %c0_3] : memref<160x512xf32, #tpu.memory_space<vmem>>, vector<1x512xf32>
    %cst = arith.constant dense<0.000000e+00> : vector<16x512xf32>
    %3 = tpu.matmul %0, %1, %cst {dimension_numbers = #tpu.dot_dimension_numbers<[1], [0], [0], [1], [0, 0, 1, 1], [], []>} : vector<16x16xf32>, vector<16x512xf32>, vector<16x512xf32> -> vector<16x512xf32>
    %4 = vector.broadcast %2 : vector<1x512xf32> to vector<16x512xf32>
    %5 = arith.addf %3, %4 : vector<16x512xf32>
    %6 = vector.extract_strided_slice %5 {offsets = [0, 0], sizes = [16, 128], strides = [1, 1]} : vector<16x512xf32> to vector<16x128xf32>
    %7 = math.tanh %6 : vector<16x128xf32>
    %cst_4 = arith.constant 1.000000e+00 : f32
    %8 = vector.broadcast %cst_4 : f32 to vector<16x128xf32>
    %9 = arith.mulf %8, %7 : vector<16x128xf32>
    %c24 = arith.constant 24 : index
    %c0_5 = arith.constant 0 : index
    %10 = vector.load %arg1[%c24, %c0_5] : memref<160x512xf32, #tpu.memory_space<vmem>>, vector<128x128xf32>
    %11 = vector.extract_strided_slice %5 {offsets = [0, 128], sizes = [16, 128], strides = [1, 1]} : vector<16x512xf32> to vector<16x128xf32>
    %cst_6 = arith.constant dense<0.000000e+00> : vector<16x128xf32>
    %12 = tpu.matmul %9, %10, %cst_6 {dimension_numbers = #tpu.dot_dimension_numbers<[1], [0], [0], [1], [0, 0, 1, 1], [], []>} : vector<16x128xf32>, vector<128x128xf32>, vector<16x128xf32> -> vector<16x128xf32>
    %13 = arith.addf %12, %11 : vector<16x128xf32>
    %14 = math.tanh %13 : vector<16x128xf32>
    %cst_7 = arith.constant 1.000000e+00 : f32
    %15 = vector.broadcast %cst_7 : f32 to vector<16x128xf32>
    %16 = arith.mulf %15, %14 : vector<16x128xf32>
    %17 = arith.addf %9, %16 : vector<16x128xf32>
    %c24_8 = arith.constant 24 : index
    %c128 = arith.constant 128 : index
    %18 = vector.load %arg1[%c24_8, %c128] : memref<160x512xf32, #tpu.memory_space<vmem>>, vector<128x128xf32>
    %19 = vector.extract_strided_slice %5 {offsets = [0, 256], sizes = [16, 128], strides = [1, 1]} : vector<16x512xf32> to vector<16x128xf32>
    %cst_9 = arith.constant dense<0.000000e+00> : vector<16x128xf32>
    %20 = tpu.matmul %17, %18, %cst_9 {dimension_numbers = #tpu.dot_dimension_numbers<[1], [0], [0], [1], [0, 0, 1, 1], [], []>} : vector<16x128xf32>, vector<128x128xf32>, vector<16x128xf32> -> vector<16x128xf32>
    %21 = arith.addf %20, %19 : vector<16x128xf32>
    %22 = math.tanh %21 : vector<16x128xf32>
    %cst_10 = arith.constant 1.000000e+00 : f32
    %23 = vector.broadcast %cst_10 : f32 to vector<16x128xf32>
    %24 = arith.mulf %23, %22 : vector<16x128xf32>
    %25 = arith.addf %17, %24 : vector<16x128xf32>
    %c24_11 = arith.constant 24 : index
    %c256 = arith.constant 256 : index
    %26 = vector.load %arg1[%c24_11, %c256] : memref<160x512xf32, #tpu.memory_space<vmem>>, vector<128x128xf32>
    %27 = vector.extract_strided_slice %5 {offsets = [0, 384], sizes = [16, 128], strides = [1, 1]} : vector<16x512xf32> to vector<16x128xf32>
    %cst_12 = arith.constant dense<0.000000e+00> : vector<16x128xf32>
    %28 = tpu.matmul %25, %26, %cst_12 {dimension_numbers = #tpu.dot_dimension_numbers<[1], [0], [0], [1], [0, 0, 1, 1], [], []>} : vector<16x128xf32>, vector<128x128xf32>, vector<16x128xf32> -> vector<16x128xf32>
    %29 = arith.addf %28, %27 : vector<16x128xf32>
    %30 = math.tanh %29 : vector<16x128xf32>
    %cst_13 = arith.constant 1.000000e+00 : f32
    %31 = vector.broadcast %cst_13 : f32 to vector<16x128xf32>
    %32 = arith.mulf %31, %30 : vector<16x128xf32>
    %33 = arith.addf %25, %32 : vector<16x128xf32>
    %c24_14 = arith.constant 24 : index
    %c384 = arith.constant 384 : index
    %34 = vector.load %arg1[%c24_14, %c384] : memref<160x512xf32, #tpu.memory_space<vmem>>, vector<128x128xf32>
    %c152 = arith.constant 152 : index
    %c0_15 = arith.constant 0 : index
    %35 = vector.load %arg1[%c152, %c0_15] : memref<160x512xf32, #tpu.memory_space<vmem>>, vector<1x128xf32>
    %cst_16 = arith.constant dense<0.000000e+00> : vector<16x128xf32>
    %36 = tpu.matmul %33, %34, %cst_16 {dimension_numbers = #tpu.dot_dimension_numbers<[1], [0], [0], [1], [0, 0, 1, 1], [], []>} : vector<16x128xf32>, vector<128x128xf32>, vector<16x128xf32> -> vector<16x128xf32>
    %37 = vector.broadcast %35 : vector<1x128xf32> to vector<16x128xf32>
    %38 = arith.addf %36, %37 : vector<16x128xf32>
    %c0_17 = arith.constant 0 : index
    %c0_18 = arith.constant 0 : index
    %39 = vector.load %arg2[%c0_17, %c0_18] : memref<16x128xf32, #tpu.memory_space<vmem>>, vector<16x128xf32>
    tpu.vector_store %arg2[%c0_17, %c0_18], %38 {strides = array<i32>} : memref<16x128xf32, #tpu.memory_space<vmem>>, vector<16x128xf32>,
    return
  }
}

</mosaic_0001>

<llo_original>
// kernel: nais_net_untied_forward.1
$region0: #{nais_net_untied_forward.1}
  #allocation0 [shape = 'u32[]', space=smem, size = 0x4, offset = 0x4, fixed_abs, tag = 'smem constant byte address 0x4 - core index']
  #allocation1 [shape = 'u32[144,128]{1,0:T(1,128)}', space=vmem, size = 0x12000, scoped, tag = 'internal scratch']
  %s0 = inlined_call_operand.vmem [shape: f32[16,16], index: 0, kind: input, shape index: {}]
  %s1 = inlined_call_operand.vmem [shape: f32[160,512], index: 1, kind: input, shape index: {}]
  %s2 = inlined_call_operand.vmem [shape: f32[16,128], index: 2, kind: output, shape index: {}]
  %s3 = sld [smem:[#allocation0]]
  $region18: #{nais_net_untied_forward.1} parent=0
    _
  %s5 = ssub.s32 1, %s3
  %s6 = scalar_select 0, %s5, %s3
  // Predicated region
  $region2: #{nais_net_untied_forward.1} parent=0 // pred_check
    _
  $region3: #{nais_net_untied_forward.1} parent=0 // pred_check_branch
    %8 = sbr.rel (0) target = $region5
  $region4: #{nais_net_untied_forward.1} parent=0 // pred_region
    _
  $region5: #{nais_net_untied_forward.1} parent=0 // pred_fallthru
    _
  // Predicated region
  $region6: #{nais_net_untied_forward.1} parent=0 // pred_check
    _
  $region7: #{nais_net_untied_forward.1} parent=0 // pred_check_branch
    %10 = sbr.rel (0) target = $region9
  $region8: #{nais_net_untied_forward.1} parent=0 // pred_region
    _
  $region9: #{nais_net_untied_forward.1} parent=0 // pred_fallthru
    _
  %v11 = vld [vmem:[%s0] sm:$0xff]
  %v12 = vld [vmem:[%s0 + $0x8] sm:$0xff]
  %v13 = vld [vmem:[%s1] sm:$0xff]
  %v14 = vld [vmem:[%s1 + $0x8] sm:$0xff]
  %v15 = vld [vmem:[%s1 + $0x10] sm:$0xff]
  %v16 = vld [vmem:[%s1 + $0x18] sm:$0xff]
  %v17 = vld [vmem:[%s1 + $0x20] sm:$0xff]
  %v18 = vld [vmem:[%s1 + $0x28] sm:$0xff]
  %v19 = vld [vmem:[%s1 + $0x30] sm:$0xff]
  %v20 = vld [vmem:[%s1 + $0x38] sm:$0xff]
  %s21 = scalar_lea.vmem %s1, 64
  %v22 = vld [vmem:[%s21] ss:$8 sm:$0xf]
  %v24 = vlaneseq
  %v25 = vshrl.u32 %v24, 7
  %v26 = vsub.s32 0, %v25
  %v27 = vrot.slane %v22, %v26
  %v28 = vlaneseq
  %v29 = vshrl.u32 %v28, 7
  %v30 = vsub.s32 1, %v29
  %v31 = vrot.slane %v22, %v30
  %v32 = vlaneseq
  %v33 = vshrl.u32 %v32, 7
  %v34 = vsub.s32 2, %v33
  %v35 = vrot.slane %v22, %v34
  %v36 = vlaneseq
  %v37 = vshrl.u32 %v36, 7
  %v38 = vsub.s32 3, %v37
  %v39 = vrot.slane %v22, %v38
  %vm44 = vcmask 130048
  %v46 = vsel %vm44, %v11, 0
  %v49 = vsel %vm44, %v12, 0
  %51 = vmatprep.subr.mxu0 %v14
  %52 = vmatpush1.msra.mxu0 %v13
  %53 = vmatprep.subr.mxu0 %v18
  %54 = vmatpush1.msra.mxu0 %v17
  %55 = vmatprep.subr.mxu0 0.0
  %56 = vmatpush1.msra.mxu0 0.0
  %57 = vmatprep.subr.mxu0 0.0
  %58 = vmatpush1.msra.mxu0 0.0
  %59 = vmatprep.subr.mxu0 0.0
  %60 = vmatpush1.msra.mxu0 0.0
  %61 = vmatprep.subr.mxu0 0.0
  %62 = vmatpush1.msra.mxu0 0.0
  %63 = vmatprep.subr.mxu0 0.0
  %64 = vmatpush1.msra.mxu0 0.0
  %65 = vmatprep.subr.mxu0 0.0
  %66 = vmatpush1.msra.mxu0 0.0
  %67 = vmatprep.subr.mxu0 0.0
  %68 = vmatpush1.msra.mxu0 0.0
  %69 = vmatprep.subr.mxu0 0.0
  %70 = vmatpush1.msra.mxu0 0.0
  %71 = vmatprep.subr.mxu0 0.0
  %72 = vmatpush1.msra.mxu0 0.0
  %73 = vmatprep.subr.mxu0 0.0
  %74 = vmatpush1.msra.mxu0 0.0
  %75 = vmatprep.subr.mxu0 0.0
  %76 = vmatpush1.msra.mxu0 0.0
  %77 = vmatprep.subr.mxu0 0.0
  %78 = vmatpush1.msra.mxu0 0.0
  %79 = vmatprep.subr.mxu0 0.0
  %80 = vmatpush1.msra.mxu0 0.0
  %81 = vmatprep.subr.mxu0 0.0
  %82 = vmatpush1.msra.mxu0 0.0
  %83 = vmatprep.subr.mxu0 0.0
  %84 = vmatpush1.msra.mxu0 0.0
  %85 = vmatprep.subr.mxu0 0.0
  %86 = vmatpush1.msra.mxu0 0.0
  %87 = vmatprep.subr.mxu0 0.0
  %88 = vmatpush1.msra.mxu0 0.0
  %89 = vmatprep.subr.mxu0 0.0
  %90 = vmatpush1.msra.mxu0 0.0
  %91 = vmatprep.subr.mxu0 0.0
  %92 = vmatpush1.msra.mxu0 0.0
  %93 = vmatprep.subr.mxu0 0.0
  %94 = vmatpush1.msra.mxu0 0.0
  %95 = vmatprep.subr.mxu0 0.0
  %96 = vmatpush1.msra.mxu0 0.0
  %97 = vmatprep.subr.mxu0 0.0
  %98 = vmatpush1.msra.mxu0 0.0
  %99 = vmatprep.subr.mxu0 0.0
  %100 = vmatpush1.msra.mxu0 0.0
  %101 = vmatprep.subr.mxu0 0.0
  %102 = vmatpush1.msra.mxu0 0.0
  %103 = vmatprep.subr.mxu0 0.0
  %104 = vmatpush1.msra.mxu0 0.0
  %105 = vmatprep.subr.mxu0 0.0
  %106 = vmatpush1.msra.mxu0 0.0
  %107 = vmatprep.subr.mxu0 0.0
  %108 = vmatpush1.msra.mxu0 0.0
  %109 = vmatprep.subr.mxu0 0.0
  %110 = vmatpush1.msra.mxu0 0.0
  %111 = vmatprep.subr.mxu0 0.0
  %112 = vmatpush1.msra.mxu0 0.0
  %113 = vmatprep.subr.mxu0 0.0
  %114 = vmatpush1.msra.mxu0 0.0
  %115 = vmatprep.mubr.f32.mxu0 0.0
  %116 = vmatmul.mubr.f32.gmra.mrb[0].mxu0 %v46
  %v117 = vpop.f32.mrb[0].mxu0
  %v118 = vadd.f32 %v27, %v117
  %v119 = vpop.f32.mrb[0].mxu0
  %v120 = vadd.f32 %v31, %v119
  %121 = vmatprep.mubr.f32.mxu0 0.0
  %122 = vmatmul.mubr.f32.gmra.mrb[0].mxu0 %v49
  %v123 = vpop.f32.mrb[0].mxu0
  %v124 = vadd.f32 %v27, %v123
  %v125 = vpop.f32.mrb[0].mxu0
  %v126 = vadd.f32 %v31, %v125
  %127 = vdwg.mxu0
  %128 = vmatprep.subr.mxu0 %v16
  %129 = vmatpush1.msra.mxu0 %v15
  %130 = vmatprep.subr.mxu0 %v20
  %131 = vmatpush1.msra.mxu0 %v19
  %132 = vmatprep.subr.mxu0 0.0
  %133 = vmatpush1.msra.mxu0 0.0
  %134 = vmatprep.subr.mxu0 0.0
  %135 = vmatpush1.msra.mxu0 0.0
  %136 = vmatprep.subr.mxu0 0.0
  %137 = vmatpush1.msra.mxu0 0.0
  %138 = vmatprep.subr.mxu0 0.0
  %139 = vmatpush1.msra.mxu0 0.0
  %140 = vmatprep.subr.mxu0 0.0
  %141 = vmatpush1.msra.mxu0 0.0
  %142 = vmatprep.subr.mxu0 0.0
  %143 = vmatpush1.msra.mxu0 0.0
  %144 = vmatprep.subr.mxu0 0.0
  %145 = vmatpush1.msra.mxu0 0.0
  %146 = vmatprep.subr.mxu0 0.0
  %147 = vmatpush1.msra.mxu0 0.0
  %148 = vmatprep.subr.mxu0 0.0
  %149 = vmatpush1.msra.mxu0 0.0
  %150 = vmatprep.subr.mxu0 0.0
  %151 = vmatpush1.msra.mxu0 0.0
  %152 = vmatprep.subr.mxu0 0.0
  %153 = vmatpush1.msra.mxu0 0.0
  %154 = vmatprep.subr.mxu0 0.0
  %155 = vmatpush1.msra.mxu0 0.0
  %156 = vmatprep.subr.mxu0 0.0
  %157 = vmatpush1.msra.mxu0 0.0
  %158 = vmatprep.subr.mxu0 0.0
  %159 = vmatpush1.msra.mxu0 0.0
  %160 = vmatprep.subr.mxu0 0.0
  %161 = vmatpush1.msra.mxu0 0.0
  %162 = vmatprep.subr.mxu0 0.0
  %163 = vmatpush1.msra.mxu0 0.0
  %164 = vmatprep.subr.mxu0 0.0
  %165 = vmatpush1.msra.mxu0 0.0
  %166 = vmatprep.subr.mxu0 0.0
  %167 = vmatpush1.msra.mxu0 0.0
  %168 = vmatprep.subr.mxu0 0.0
  %169 = vmatpush1.msra.mxu0 0.0
  %170 = vmatprep.subr.mxu0 0.0
  %171 = vmatpush1.msra.mxu0 0.0
  %172 = vmatprep.subr.mxu0 0.0
  %173 = vmatpush1.msra.mxu0 0.0
  %174 = vmatprep.subr.mxu0 0.0
  %175 = vmatpush1.msra.mxu0 0.0
  %176 = vmatprep.subr.mxu0 0.0
  %177 = vmatpush1.msra.mxu0 0.0
  %178 = vmatprep.subr.mxu0 0.0
  %179 = vmatpush1.msra.mxu0 0.0
  %180 = vmatprep.subr.mxu0 0.0
  %181 = vmatpush1.msra.mxu0 0.0
  %182 = vmatprep.subr.mxu0 0.0
  %183 = vmatpush1.msra.mxu0 0.0
  %184 = vmatprep.subr.mxu0 0.0
  %185 = vmatpush1.msra.mxu0 0.0
  %186 = vmatprep.subr.mxu0 0.0
  %187 = vmatpush1.msra.mxu0 0.0
  %188 = vmatprep.subr.mxu0 0.0
  %189 = vmatpush1.msra.mxu0 0.0
  %190 = vmatprep.subr.mxu0 0.0
  %191 = vmatpush1.msra.mxu0 0.0
  %192 = vmatprep.mubr.f32.mxu0 0.0
  %193 = vmatmul.mubr.f32.gmra.mrb[0].mxu0 %v46
  %v194 = vpop.f32.mrb[0].mxu0
  %v195 = vadd.f32 %v35, %v194
  %v196 = vpop.f32.mrb[0].mxu0
  %v197 = vadd.f32 %v39, %v196
  %198 = vmatprep.mubr.f32.mxu0 0.0
  %199 = vmatmul.mubr.f32.gmra.mrb[0].mxu0 %v49
  %v200 = vpop.f32.mrb[0].mxu0
  %v201 = vadd.f32 %v35, %v200
  %v202 = vpop.f32.mrb[0].mxu0
  %v203 = vadd.f32 %v39, %v202
  %204 = vdwg.mxu0
  %v205 = vtanh.pop %v118
  %v206 = vtanh.pop %v124
  %v207 = vld [vmem:[%s1 + $0x60] sm:$0xff]
  %v208 = vld [vmem:[%s1 + $0x80] sm:$0xff]
  %v209 = vld [vmem:[%s1 + $0xa0] sm:$0xff]
  %v210 = vld [vmem:[%s1 + $0xc0] sm:$0xff]
  %v211 = vld [vmem:[%s1 + $0xe0] sm:$0xff]
  %v212 = vld [vmem:[%s1 + $0x100] sm:$0xff]
  %v213 = vld [vmem:[%s1 + $0x120] sm:$0xff]
  %v214 = vld [vmem:[%s1 + $0x140] sm:$0xff]
  %v215 = vld [vmem:[%s1 + $0x160] sm:$0xff]
  %v216 = vld [vmem:[%s1 + $0x180] sm:$0xff]
  %v217 = vld [vmem:[%s1 + $0x1a0] sm:$0xff]
  %v218 = vld [vmem:[%s1 + $0x1c0] sm:$0xff]
  %v219 = vld [vmem:[%s1 + $0x1e0] sm:$0xff]
  %v220 = vld [vmem:[%s1 + $0x200] sm:$0xff]
  %v221 = vld [vmem:[%s1 + $0x220] sm:$0xff]
  %v222 = vld [vmem:[%s1 + $0x240] sm:$0xff]
  %223 = vmatprep.subr.mxu0 0.0
  %224 = vmatpush1.msra.mxu0 %v207
  %225 = vmatprep.subr.mxu0 0.0
  %226 = vmatpush1.msra.mxu0 %v208
  %227 = vmatprep.subr.mxu0 0.0
  %228 = vmatpush1.msra.mxu0 %v209
  %229 = vmatprep.subr.mxu0 0.0
  %230 = vmatpush1.msra.mxu0 %v210
  %231 = vmatprep.subr.mxu0 0.0
  %232 = vmatpush1.msra.mxu0 %v211
  %233 = vmatprep.subr.mxu0 0.0
  %234 = vmatpush1.msra.mxu0 %v212
  %235 = vmatprep.subr.mxu0 0.0
  %236 = vmatpush1.msra.mxu0 %v213
  %237 = vmatprep.subr.mxu0 0.0
  %238 = vmatpush1.msra.mxu0 %v214
  %239 = vmatprep.subr.mxu0 0.0
  %240 = vmatpush1.msra.mxu0 %v215
  %241 = vmatprep.subr.mxu0 0.0
  %242 = vmatpush1.msra.mxu0 %v216
  %243 = vmatprep.subr.mxu0 0.0
  %244 = vmatpush1.msra.mxu0 %v217
  %245 = vmatprep.subr.mxu0 0.0
  %246 = vmatpush1.msra.mxu0 %v218
  %247 = vmatprep.subr.mxu0 0.0
  %248 = vmatpush1.msra.mxu0 %v219
  %249 = vmatprep.subr.mxu0 0.0
  %250 = vmatpush1.msra.mxu0 %v220
  %251 = vmatprep.subr.mxu0 0.0
  %252 = vmatpush1.msra.mxu0 %v221
  %253 = vmatprep.subr.mxu0 0.0
  %254 = vmatpush1.msra.mxu0 %v222
  %255 = vmatprep.subr.mxu0 0.0
  %256 = vmatpush1.msra.mxu0 0.0
  %257 = vmatprep.subr.mxu0 0.0
  %258 = vmatpush1.msra.mxu0 0.0
  %259 = vmatprep.subr.mxu0 0.0
  %260 = vmatpush1.msra.mxu0 0.0
  %261 = vmatprep.subr.mxu0 0.0
  %262 = vmatpush1.msra.mxu0 0.0
  %263 = vmatprep.subr.mxu0 0.0
  %264 = vmatpush1.msra.mxu0 0.0
  %265 = vmatprep.subr.mxu0 0.0
  %266 = vmatpush1.msra.mxu0 0.0
  %267 = vmatprep.subr.mxu0 0.0
  %268 = vmatpush1.msra.mxu0 0.0
  %269 = vmatprep.subr.mxu0 0.0
  %270 = vmatpush1.msra.mxu0 0.0
  %271 = vmatprep.subr.mxu0 0.0
  %272 = vmatpush1.msra.mxu0 0.0
  %273 = vmatprep.subr.mxu0 0.0
  %274 = vmatpush1.msra.mxu0 0.0
  %275 = vmatprep.subr.mxu0 0.0
  %276 = vmatpush1.msra.mxu0 0.0
  %277 = vmatprep.subr.mxu0 0.0
  %278 = vmatpush1.msra.mxu0 0.0
  %279 = vmatprep.subr.mxu0 0.0
  %280 = vmatpush1.msra.mxu0 0.0
  %281 = vmatprep.subr.mxu0 0.0
  %282 = vmatpush1.msra.mxu0 0.0
  %283 = vmatprep.subr.mxu0 0.0
  %284 = vmatpush1.msra.mxu0 0.0
  %285 = vmatprep.subr.mxu0 0.0
  %286 = vmatpush1.msra.mxu0 0.0
  %287 = vmatprep.mubr.f32.mxu0 0.0
  %288 = vmatmul.mubr.f32.gmra.mrb[0].mxu0 %v205
  %v289 = vpop.f32.mrb[0].mxu0
  %v290 = vadd.f32 %v120, %v289
  %v291 = vpop.f32.mrb[0].mxu0
  %292 = vmatprep.mubr.f32.mxu0 0.0
  %293 = vmatmul.mubr.f32.gmra.mrb[0].mxu0 %v206
  %v294 = vpop.f32.mrb[0].mxu0
  %v295 = vadd.f32 %v126, %v294
  %v296 = vpop.f32.mrb[0].mxu0
  %297 = vdwg.mxu0
  %v298 = vtanh.pop %v290
  %v299 = vtanh.pop %v295
  %v300 = vadd.f32 %v205, %v298
  %v301 = vadd.f32 %v206, %v299
  %v302 = vld [vmem:[%s1 + $0x68] sm:$0xff]
  %v303 = vld [vmem:[%s1 + $0x88] sm:$0xff]
  %v304 = vld [vmem:[%s1 + $0xa8] sm:$0xff]
  %v305 = vld [vmem:[%s1 + $0xc8] sm:$0xff]
  %v306 = vld [vmem:[%s1 + $0xe8] sm:$0xff]
  %v307 = vld [vmem:[%s1 + $0x108] sm:$0xff]
  %v308 = vld [vmem:[%s1 + $0x128] sm:$0xff]
  %v309 = vld [vmem:[%s1 + $0x148] sm:$0xff]
  %v310 = vld [vmem:[%s1 + $0x168] sm:$0xff]
  %v311 = vld [vmem:[%s1 + $0x188] sm:$0xff]
  %v312 = vld [vmem:[%s1 + $0x1a8] sm:$0xff]
  %v313 = vld [vmem:[%s1 + $0x1c8] sm:$0xff]
  %v314 = vld [vmem:[%s1 + $0x1e8] sm:$0xff]
  %v315 = vld [vmem:[%s1 + $0x208] sm:$0xff]
  %v316 = vld [vmem:[%s1 + $0x228] sm:$0xff]
  %v317 = vld [vmem:[%s1 + $0x248] sm:$0xff]
  %318 = vmatprep.subr.mxu0 0.0
  %319 = vmatpush1.msra.mxu0 %v302
  %320 = vmatprep.subr.mxu0 0.0
  %321 = vmatpush1.msra.mxu0 %v303
  %322 = vmatprep.subr.mxu0 0.0
  %323 = vmatpush1.msra.mxu0 %v304
  %324 = vmatprep.subr.mxu0 0.0
  %325 = vmatpush1.msra.mxu0 %v305
  %326 = vmatprep.subr.mxu0 0.0
  %327 = vmatpush1.msra.mxu0 %v306
  %328 = vmatprep.subr.mxu0 0.0
  %329 = vmatpush1.msra.mxu0 %v307
  %330 = vmatprep.subr.mxu0 0.0
  %331 = vmatpush1.msra.mxu0 %v308
  %332 = vmatprep.subr.mxu0 0.0
  %333 = vmatpush1.msra.mxu0 %v309
  %334 = vmatprep.subr.mxu0 0.0
  %335 = vmatpush1.msra.mxu0 %v310
  %336 = vmatprep.subr.mxu0 0.0
  %337 = vmatpush1.msra.mxu0 %v311
  %338 = vmatprep.subr.mxu0 0.0
  %339 = vmatpush1.msra.mxu0 %v312
  %340 = vmatprep.subr.mxu0 0.0
  %341 = vmatpush1.msra.mxu0 %v313
  %342 = vmatprep.subr.mxu0 0.0
  %343 = vmatpush1.msra.mxu0 %v314
  %344 = vmatprep.subr.mxu0 0.0
  %345 = vmatpush1.msra.mxu0 %v315
  %346 = vmatprep.subr.mxu0 0.0
  %347 = vmatpush1.msra.mxu0 %v316
  %348 = vmatprep.subr.mxu0 0.0
  %349 = vmatpush1.msra.mxu0 %v317
  %350 = vmatprep.subr.mxu0 0.0
  %351 = vmatpush1.msra.mxu0 0.0
  %352 = vmatprep.subr.mxu0 0.0
  %353 = vmatpush1.msra.mxu0 0.0
  %354 = vmatprep.subr.mxu0 0.0
  %355 = vmatpush1.msra.mxu0 0.0
  %356 = vmatprep.subr.mxu0 0.0
  %357 = vmatpush1.msra.mxu0 0.0
  %358 = vmatprep.subr.mxu0 0.0
  %359 = vmatpush1.msra.mxu0 0.0
  %360 = vmatprep.subr.mxu0 0.0
  %361 = vmatpush1.msra.mxu0 0.0
  %362 = vmatprep.subr.mxu0 0.0
  %363 = vmatpush1.msra.mxu0 0.0
  %364 = vmatprep.subr.mxu0 0.0
  %365 = vmatpush1.msra.mxu0 0.0
  %366 = vmatprep.subr.mxu0 0.0
  %367 = vmatpush1.msra.mxu0 0.0
  %368 = vmatprep.subr.mxu0 0.0
  %369 = vmatpush1.msra.mxu0 0.0
  %370 = vmatprep.subr.mxu0 0.0
  %371 = vmatpush1.msra.mxu0 0.0
  %372 = vmatprep.subr.mxu0 0.0
  %373 = vmatpush1.msra.mxu0 0.0
  %374 = vmatprep.subr.mxu0 0.0
  %375 = vmatpush1.msra.mxu0 0.0
  %376 = vmatprep.subr.mxu0 0.0
  %377 = vmatpush1.msra.mxu0 0.0
  %378 = vmatprep.subr.mxu0 0.0
  %379 = vmatpush1.msra.mxu0 0.0
  %380 = vmatprep.subr.mxu0 0.0
  %381 = vmatpush1.msra.mxu0 0.0
  %382 = vmatprep.mubr.f32.mxu0 0.0
  %383 = vmatmul.mubr.f32.gmra.mrb[0].mxu0 %v300
  %v384 = vpop.f32.mrb[0].mxu0
  %v385 = vadd.f32 %v195, %v384
  %v386 = vpop.f32.mrb[0].mxu0
  %387 = vmatprep.mubr.f32.mxu0 0.0
  %388 = vmatmul.mubr.f32.gmra.mrb[0].mxu0 %v301
  %v389 = vpop.f32.mrb[0].mxu0
  %v390 = vadd.f32 %v201, %v389
  %v391 = vpop.f32.mrb[0].mxu0
  %392 = vdwg.mxu0
  %v393 = vtanh.pop %v385
  %v394 = vtanh.pop %v390
  %v395 = vadd.f32 %v300, %v393
  %v396 = vadd.f32 %v301, %v394
  %v397 = vld [vmem:[%s1 + $0x70] sm:$0xff]
  %v398 = vld [vmem:[%s1 + $0x90] sm:$0xff]
  %v399 = vld [vmem:[%s1 + $0xb0] sm:$0xff]
  %v400 = vld [vmem:[%s1 + $0xd0] sm:$0xff]
  %v401 = vld [vmem:[%s1 + $0xf0] sm:$0xff]
  %v402 = vld [vmem:[%s1 + $0x110] sm:$0xff]
  %v403 = vld [vmem:[%s1 + $0x130] sm:$0xff]
  %v404 = vld [vmem:[%s1 + $0x150] sm:$0xff]
  %v405 = vld [vmem:[%s1 + $0x170] sm:$0xff]
  %v406 = vld [vmem:[%s1 + $0x190] sm:$0xff]
  %v407 = vld [vmem:[%s1 + $0x1b0] sm:$0xff]
  %v408 = vld [vmem:[%s1 + $0x1d0] sm:$0xff]
  %v409 = vld [vmem:[%s1 + $0x1f0] sm:$0xff]
  %v410 = vld [vmem:[%s1 + $0x210] sm:$0xff]
  %v411 = vld [vmem:[%s1 + $0x230] sm:$0xff]
  %v412 = vld [vmem:[%s1 + $0x250] sm:$0xff]
  %413 = vmatprep.subr.mxu0 0.0
  %414 = vmatpush1.msra.mxu0 %v397
  %415 = vmatprep.subr.mxu0 0.0
  %416 = vmatpush1.msra.mxu0 %v398
  %417 = vmatprep.subr.mxu0 0.0
  %418 = vmatpush1.msra.mxu0 %v399
  %419 = vmatprep.subr.mxu0 0.0
  %420 = vmatpush1.msra.mxu0 %v400
  %421 = vmatprep.subr.mxu0 0.0
  %422 = vmatpush1.msra.mxu0 %v401
  %423 = vmatprep.subr.mxu0 0.0
  %424 = vmatpush1.msra.mxu0 %v402
  %425 = vmatprep.subr.mxu0 0.0
  %426 = vmatpush1.msra.mxu0 %v403
  %427 = vmatprep.subr.mxu0 0.0
  %428 = vmatpush1.msra.mxu0 %v404
  %429 = vmatprep.subr.mxu0 0.0
  %430 = vmatpush1.msra.mxu0 %v405
  %431 = vmatprep.subr.mxu0 0.0
  %432 = vmatpush1.msra.mxu0 %v406
  %433 = vmatprep.subr.mxu0 0.0
  %434 = vmatpush1.msra.mxu0 %v407
  %435 = vmatprep.subr.mxu0 0.0
  %436 = vmatpush1.msra.mxu0 %v408
  %437 = vmatprep.subr.mxu0 0.0
  %438 = vmatpush1.msra.mxu0 %v409
  %439 = vmatprep.subr.mxu0 0.0
  %440 = vmatpush1.msra.mxu0 %v410
  %441 = vmatprep.subr.mxu0 0.0
  %442 = vmatpush1.msra.mxu0 %v411
  %443 = vmatprep.subr.mxu0 0.0
  %444 = vmatpush1.msra.mxu0 %v412
  %445 = vmatprep.subr.mxu0 0.0
  %446 = vmatpush1.msra.mxu0 0.0
  %447 = vmatprep.subr.mxu0 0.0
  %448 = vmatpush1.msra.mxu0 0.0
  %449 = vmatprep.subr.mxu0 0.0
  %450 = vmatpush1.msra.mxu0 0.0
  %451 = vmatprep.subr.mxu0 0.0
  %452 = vmatpush1.msra.mxu0 0.0
  %453 = vmatprep.subr.mxu0 0.0
  %454 = vmatpush1.msra.mxu0 0.0
  %455 = vmatprep.subr.mxu0 0.0
  %456 = vmatpush1.msra.mxu0 0.0
  %457 = vmatprep.subr.mxu0 0.0
  %458 = vmatpush1.msra.mxu0 0.0
  %459 = vmatprep.subr.mxu0 0.0
  %460 = vmatpush1.msra.mxu0 0.0
  %461 = vmatprep.subr.mxu0 0.0
  %462 = vmatpush1.msra.mxu0 0.0
  %463 = vmatprep.subr.mxu0 0.0
  %464 = vmatpush1.msra.mxu0 0.0
  %465 = vmatprep.subr.mxu0 0.0
  %466 = vmatpush1.msra.mxu0 0.0
  %467 = vmatprep.subr.mxu0 0.0
  %468 = vmatpush1.msra.mxu0 0.0
  %469 = vmatprep.subr.mxu0 0.0
  %470 = vmatpush1.msra.mxu0 0.0
  %471 = vmatprep.subr.mxu0 0.0
  %472 = vmatpush1.msra.mxu0 0.0
  %473 = vmatprep.subr.mxu0 0.0
  %474 = vmatpush1.msra.mxu0 0.0
  %475 = vmatprep.subr.mxu0 0.0
  %476 = vmatpush1.msra.mxu0 0.0
  %477 = vmatprep.mubr.f32.mxu0 0.0
  %478 = vmatmul.mubr.f32.gmra.mrb[0].mxu0 %v395
  %v479 = vpop.f32.mrb[0].mxu0
  %v480 = vadd.f32 %v197, %v479
  %v481 = vpop.f32.mrb[0].mxu0
  %482 = vmatprep.mubr.f32.mxu0 0.0
  %483 = vmatmul.mubr.f32.gmra.mrb[0].mxu0 %v396
  %v484 = vpop.f32.mrb[0].mxu0
  %v485 = vadd.f32 %v203, %v484
  %v486 = vpop.f32.mrb[0].mxu0
  %487 = vdwg.mxu0
  %v488 = vtanh.pop %v480
  %v489 = vtanh.pop %v485
  %v490 = vadd.f32 %v395, %v488
  %v491 = vadd.f32 %v396, %v489
  %v492 = vld [vmem:[%s1 + $0x78] sm:$0xff]
  %v493 = vld [vmem:[%s1 + $0x98] sm:$0xff]
  %v494 = vld [vmem:[%s1 + $0xb8] sm:$0xff]
  %v495 = vld [vmem:[%s1 + $0xd8] sm:$0xff]
  %v496 = vld [vmem:[%s1 + $0xf8] sm:$0xff]
  %v497 = vld [vmem:[%s1 + $0x118] sm:$0xff]
  %v498 = vld [vmem:[%s1 + $0x138] sm:$0xff]
  %v499 = vld [vmem:[%s1 + $0x158] sm:$0xff]
  %v500 = vld [vmem:[%s1 + $0x178] sm:$0xff]
  %v501 = vld [vmem:[%s1 + $0x198] sm:$0xff]
  %v502 = vld [vmem:[%s1 + $0x1b8] sm:$0xff]
  %v503 = vld [vmem:[%s1 + $0x1d8] sm:$0xff]
  %v504 = vld [vmem:[%s1 + $0x1f8] sm:$0xff]
  %v505 = vld [vmem:[%s1 + $0x218] sm:$0xff]
  %v506 = vld [vmem:[%s1 + $0x238] sm:$0xff]
  %v507 = vld [vmem:[%s1 + $0x258] sm:$0xff]
  %v508 = vld [vmem:[%s1 + $0x260] ss:$0 sm:$0xff]
  %509 = vmatprep.subr.mxu0 0.0
  %510 = vmatpush1.msra.mxu0 %v492
  %511 = vmatprep.subr.mxu0 0.0
  %512 = vmatpush1.msra.mxu0 %v493
  %513 = vmatprep.subr.mxu0 0.0
  %514 = vmatpush1.msra.mxu0 %v494
  %515 = vmatprep.subr.mxu0 0.0
  %516 = vmatpush1.msra.mxu0 %v495
  %517 = vmatprep.subr.mxu0 0.0
  %518 = vmatpush1.msra.mxu0 %v496
  %519 = vmatprep.subr.mxu0 0.0
  %520 = vmatpush1.msra.mxu0 %v497
  %521 = vmatprep.subr.mxu0 0.0
  %522 = vmatpush1.msra.mxu0 %v498
  %523 = vmatprep.subr.mxu0 0.0
  %524 = vmatpush1.msra.mxu0 %v499
  %525 = vmatprep.subr.mxu0 0.0
  %526 = vmatpush1.msra.mxu0 %v500
  %527 = vmatprep.subr.mxu0 0.0
  %528 = vmatpush1.msra.mxu0 %v501
  %529 = vmatprep.subr.mxu0 0.0
  %530 = vmatpush1.msra.mxu0 %v502
  %531 = vmatprep.subr.mxu0 0.0
  %532 = vmatpush1.msra.mxu0 %v503
  %533 = vmatprep.subr.mxu0 0.0
  %534 = vmatpush1.msra.mxu0 %v504
  %535 = vmatprep.subr.mxu0 0.0
  %536 = vmatpush1.msra.mxu0 %v505
  %537 = vmatprep.subr.mxu0 0.0
  %538 = vmatpush1.msra.mxu0 %v506
  %539 = vmatprep.subr.mxu0 0.0
  %540 = vmatpush1.msra.mxu0 %v507
  %541 = vmatprep.subr.mxu0 0.0
  %542 = vmatpush1.msra.mxu0 0.0
  %543 = vmatprep.subr.mxu0 0.0
  %544 = vmatpush1.msra.mxu0 0.0
  %545 = vmatprep.subr.mxu0 0.0
  %546 = vmatpush1.msra.mxu0 0.0
  %547 = vmatprep.subr.mxu0 0.0
  %548 = vmatpush1.msra.mxu0 0.0
  %549 = vmatprep.subr.mxu0 0.0
  %550 = vmatpush1.msra.mxu0 0.0
  %551 = vmatprep.subr.mxu0 0.0
  %552 = vmatpush1.msra.mxu0 0.0
  %553 = vmatprep.subr.mxu0 0.0
  %554 = vmatpush1.msra.mxu0 0.0
  %555 = vmatprep.subr.mxu0 0.0
  %556 = vmatpush1.msra.mxu0 0.0
  %557 = vmatprep.subr.mxu0 0.0
  %558 = vmatpush1.msra.mxu0 0.0
  %559 = vmatprep.subr.mxu0 0.0
  %560 = vmatpush1.msra.mxu0 0.0
  %561 = vmatprep.subr.mxu0 0.0
  %562 = vmatpush1.msra.mxu0 0.0
  %563 = vmatprep.subr.mxu0 0.0
  %564 = vmatpush1.msra.mxu0 0.0
  %565 = vmatprep.subr.mxu0 0.0
  %566 = vmatpush1.msra.mxu0 0.0
  %567 = vmatprep.subr.mxu0 0.0
  %568 = vmatpush1.msra.mxu0 0.0
  %569 = vmatprep.subr.mxu0 0.0
  %570 = vmatpush1.msra.mxu0 0.0
  %571 = vmatprep.subr.mxu0 0.0
  %572 = vmatpush1.msra.mxu0 0.0
  %573 = vmatprep.mubr.f32.mxu0 0.0
  %574 = vmatmul.mubr.f32.gmra.mrb[0].mxu0 %v490
  %v575 = vpop.f32.mrb[0].mxu0
  %v576 = vadd.f32 %v508, %v575
  %v577 = vpop.f32.mrb[0].mxu0
  %578 = vmatprep.mubr.f32.mxu0 0.0
  %579 = vmatmul.mubr.f32.gmra.mrb[0].mxu0 %v491
  %v580 = vpop.f32.mrb[0].mxu0
  %v581 = vadd.f32 %v508, %v580
  %v582 = vpop.f32.mrb[0].mxu0
  %583 = vdwg.mxu0
  %584 = vst [vmem:[%s2] sm:$0xff] %v576
  %585 = vst [vmem:[%s2 + $0x8] sm:$0xff] %v581
  // Predicated region
  $region10: #{nais_net_untied_forward.1} parent=0 // pred_check
    _
  $region11: #{nais_net_untied_forward.1} parent=0 // pred_check_branch
    %587 = sbr.rel (0) target = $region13
  $region12: #{nais_net_untied_forward.1} parent=0 // pred_region
    _
  $region13: #{nais_net_untied_forward.1} parent=0 // pred_fallthru
    _
  // Predicated region
  $region14: #{nais_net_untied_forward.1} parent=0 // pred_check
    _
  $region15: #{nais_net_untied_forward.1} parent=0 // pred_check_branch
    %589 = sbr.rel (0) target = $region17
  $region16: #{nais_net_untied_forward.1} parent=0 // pred_region
    _
  $region17: #{nais_net_untied_forward.1} parent=0 // pred_fallthru
    _

</llo_original>
